<compile_context>
chip_gen: v6e
topology: v6e:2x2x1
jax: 0.10.0
libtpu: 0.0.40
codegen_flags: <defaults>
</compile_context>

<pallas_src>
import jax
import jax.numpy as jnp
from jax.experimental import pallas as pl
from jax.experimental.pallas import tpu as pltpu


def _round_up(a, b):
    return ((a + b - 1) // b) * b


def _pick_row_tile(H, W):
    """Output-row tile: multiple of 8, ~1 MiB of input per block, <= 256 rows."""
    budget_rows = (1024 * 1024) // max(4 * W, 1)
    tr = max(8, min(256, (budget_rows // 8) * 8))
    tr = min(tr, _round_up(H, 8))
    return max(8, tr)


def sobel_layer(x):
    """x: (N, 1, H, W) f32 -> (N, 1, H+1, W+1) f32, matching PyTorch SobelLayer."""
    N, C, H, W = x.shape
    assert C == 1, "SobelLayer conv kernels are (1,1,2,2): input must be single-channel"
    x = x.astype(jnp.float32)
    Ho, Wo = H + 1, W + 1

    TR = _pick_row_tile(H, W)     # output rows per tile (multiple of 8)
    T = pl.cdiv(Ho, TR)           # number of output row tiles
    T_in = pl.cdiv(H, TR)         # number of in-range input row tiles (>= 1)
    HB = TR // 8                  # halo block-row scale (halo blocks are 8 rows)

    # ---------------- shared in-kernel gradient construction -----------------
    # For output row i (global), column j:
    #   gx[i,j] = |x_pad[i+1, j+1] - x_pad[i+1, j]|   (kernel [[0,0],[-1,1]])
    #   gy[i,j] = |x_pad[i+1, j+1] - x_pad[i,   j+1]| (kernel [[0,-1],[0,1]])
    # with x_pad the zero-padded image.  cur == x_pad[i+1, 1:W+1] is the masked
    # raw row; the halo block provides x[t*TR - 1] (row above the tile).
    def _grads(x_ref, halo_ref):
        t = pl.program_id(1)
        rows = jax.lax.broadcasted_iota(jnp.int32, (TR, W), 0) + t * TR
        # Mask rows >= H (bottom zero pad + undefined partial-block rows).
        cur = jnp.where(rows < H, x_ref[0, 0], 0.0)                # (TR, W)
        # Row above the tile: x[t*TR - 1] for t >= 1, zero pad for t == 0.
        halo = jnp.where(t > 0, halo_ref[0, 0, 7:8, :], 0.0)       # (1, W)
        prev = jnp.concatenate([halo, cur[: TR - 1, :]], axis=0)   # (TR, W)
        zcol = jnp.zeros((TR, 1), jnp.float32)
        ce = jnp.concatenate([cur, zcol], axis=1)    # x_pad[i+1, 1:W+2]  (TR, Wo)
        le = jnp.concatenate([zcol, cur], axis=1)    # x_pad[i+1, 0:W+1]  (TR, Wo)
        pe = jnp.concatenate([prev, zcol], axis=1)   # x_pad[i,   1:W+2]  (TR, Wo)
        gx = jnp.abs(ce - le)
        gy = jnp.abs(ce - pe)
        return gx, gy

    # ---------------- pass 1: per-tile min/max partials ----------------------
    def _stats_kernel(x_ref, halo_ref, mm_ref):
        gx, gy = _grads(x_ref, halo_ref)
        # Out-of-range rows contribute only zeros, which the true gradient maps
        # already contain (bottom pad row / right pad column), so the partial
        # min/max stay exact.
        mm_ref[0, 0, 0:1, :] = jnp.full((1, 128), jnp.min(gx), jnp.float32)
        mm_ref[0, 0, 1:2, :] = jnp.full((1, 128), jnp.max(gx), jnp.float32)
        mm_ref[0, 0, 2:3, :] = jnp.full((1, 128), jnp.min(gy), jnp.float32)
        mm_ref[0, 0, 3:4, :] = jnp.full((1, 128), jnp.max(gy), jnp.float32)

    # ---------------- pass 2: recompute, normalize (SMEM scalars), sum -------
    def _norm_kernel(params_ref, x_ref, halo_ref, o_ref):
        gx, gy = _grads(x_ref, halo_ref)
        mn_x = params_ref[0]
        inv_x = params_ref[1]
        mn_y = params_ref[2]
        inv_y = params_ref[3]
        o_ref[0, 0] = (gx - mn_x) * inv_x + (gy - mn_y) * inv_y

    # Raw-input block for the tile's own rows.  The block index is clamped so
    # the DMA start always lies inside the array (the last output tile can sit
    # entirely below the input; its rows are masked to zero in-kernel anyway).
    x_spec = pl.BlockSpec(
        (1, 1, TR, W), lambda n, t: (n, 0, jnp.minimum(t, T_in - 1), 0))
    # 8-row block whose last row is x[t*TR - 1] (the halo row above the tile).
    halo_spec = pl.BlockSpec(
        (1, 1, 8, W), lambda n, t: (n, 0, jnp.maximum(t * HB - 1, 0), 0))

    mm = pl.pallas_call(
        _stats_kernel,
        out_shape=jax.ShapeDtypeStruct((N, T, 4, 128), jnp.float32),
        grid_spec=pltpu.PrefetchScalarGridSpec(
            num_scalar_prefetch=0,
            grid=(N, T),
            in_specs=[x_spec, halo_spec],
            out_specs=pl.BlockSpec((1, 1, 4, 128), lambda n, t: (n, t, 0, 0)),
        ),
        compiler_params=pltpu.CompilerParams(
            dimension_semantics=("parallel", "parallel")),
    )(x, x)

    # ---- tiny host combine over (N, T) partials -> 4 global scalars ---------
    vals = mm[:, :, :, 0]                                   # (N, T, 4)
    grad_min_x = jnp.min(vals[:, :, 0])
    grad_max_x = jnp.max(vals[:, :, 1])
    grad_min_y = jnp.min(vals[:, :, 2])
    grad_max_y = jnp.max(vals[:, :, 3])
    inv_x = 1.0 / (grad_max_x - grad_min_x + 0.0001)
    inv_y = 1.0 / (grad_max_y - grad_min_y + 0.0001)
    params = jnp.stack([grad_min_x, inv_x, grad_min_y, inv_y]).astype(jnp.float32)

    out = pl.pallas_call(
        _norm_kernel,
        out_shape=jax.ShapeDtypeStruct((N, 1, Ho, Wo), jnp.float32),
        grid_spec=pltpu.PrefetchScalarGridSpec(
            num_scalar_prefetch=0,
            grid=(N, T),
            in_specs=[
                pl.BlockSpec(memory_space=pltpu.MemorySpace.SMEM),  # 4 scalars
                x_spec,
                halo_spec,
            ],
            out_specs=pl.BlockSpec((1, 1, TR, Wo), lambda n, t: (n, 0, t, 0)),
        ),
        compiler_params=pltpu.CompilerParams(
            dimension_semantics=("parallel", "parallel")),
    )(params, x, x)

    return out


def _reference(x):
    """Plain-JAX reference mirroring the PyTorch forward (for sanity check)."""
    kx = jnp.array([[0.0, 0.0], [-1.0, 1.0]], jnp.float32).reshape(1, 1, 2, 2)
    ky = jnp.array([[0.0, -1.0], [0.0, 1.0]], jnp.float32).reshape(1, 1, 2, 2)
    dn = jax.lax.conv_dimension_numbers(x.shape, kx.shape, ("NCHW", "OIHW", "NCHW"))
    gx = jnp.abs(jax.lax.conv_general_dilated(x, kx, (1, 1), ((1, 1), (1, 1)),
                                              dimension_numbers=dn))
    gy = jnp.abs(jax.lax.conv_general_dilated(x, ky, (1, 1), ((1, 1), (1, 1)),
                                              dimension_numbers=dn))
    nx = (gx - gx.min()) / (gx.max() - gx.min() + 0.0001)
    ny = (gy - gy.min()) / (gy.max() - gy.min() + 0.0001)
    return nx + ny


if __name__ == "__main__":
    N, C, H, W = 2, 1, 16, 16
    key = jax.random.PRNGKey(0)
    x = jax.random.normal(key, (N, C, H, W), dtype=jnp.float32)

    out = jax.block_until_ready(jax.jit(sobel_layer)(x))
    ref = jax.block_until_ready(_reference(x))

    assert out.shape == ref.shape == (N, 1, H + 1, W + 1), (out.shape, ref.shape)
    max_err = float(jnp.max(jnp.abs(out - ref)))
    assert jnp.allclose(out, ref, atol=1e-5, rtol=1e-5), max_err

    print("KERNEL_OK")
</pallas_src>

<mosaic_0001>
module attributes {stable_mosaic.version = 11 : i64} {
  func.func @_stats_kernel(%arg0: i32, %arg1: i32, %arg2: memref<1x1x16x16xf32, #tpu.memory_space<vmem>>, %arg3: memref<1x1x8x16xf32, #tpu.memory_space<vmem>>, %arg4: memref<1x1x4x128xf32, #tpu.memory_space<vmem>>) attributes {dimension_semantics = [#tpu.dimension_semantics<parallel>, #tpu.dimension_semantics<parallel>], iteration_bounds = array<i64: 2, 2>, scalar_prefetch = 0 : i64, scratch_operands = 0 : i64, tpu.core_type = #tpu.core_type<tc>, window_params = [{transform_indices = @transform_0, window_bounds = array<i64: 1, 1, 16, 16>}, {transform_indices = @transform_1, window_bounds = array<i64: 1, 1, 8, 16>}, {transform_indices = @transform_2, window_bounds = array<i64: 1, 1, 4, 128>}]} {
    %0 = tpu.iota {dimensions = array<i32: 0>} : vector<16x16xi32>
    %c16_i32 = arith.constant 16 : i32
    %1 = arith.muli %arg1, %c16_i32 : i32
    %2 = vector.broadcast %1 : i32 to vector<16x16xi32>
    %3 = arith.addi %0, %2 : vector<16x16xi32>
    %c16_i32_0 = arith.constant 16 : i32
    %4 = vector.broadcast %c16_i32_0 : i32 to vector<16x16xi32>
    %5 = arith.cmpi slt, %3, %4 : vector<16x16xi32>
    %c0 = arith.constant 0 : index
    %c0_1 = arith.constant 0 : index
    %c0_2 = arith.constant 0 : index
    %c0_3 = arith.constant 0 : index
    %6 = vector.load %arg2[%c0, %c0_1, %c0_2, %c0_3] : memref<1x1x16x16xf32, #tpu.memory_space<vmem>>, vector<1x1x16x16xf32>
    %7 = vector.shape_cast %6 : vector<1x1x16x16xf32> to vector<16x16xf32>
    %cst = arith.constant 0.000000e+00 : f32
    %8 = vector.broadcast %cst : f32 to vector<16x16xf32>
    %9 = arith.select %5, %7, %8 : vector<16x16xi1>, vector<16x16xf32>
    %c0_i32 = arith.constant 0 : i32
    %10 = arith.cmpi sgt, %arg1, %c0_i32 : i32
    %c0_4 = arith.constant 0 : index
    %c0_5 = arith.constant 0 : index
    %c7 = arith.constant 7 : index
    %c0_6 = arith.constant 0 : index
    %11 = vector.load %arg3[%c0_4, %c0_5, %c7, %c0_6] : memref<1x1x8x16xf32, #tpu.memory_space<vmem>>, vector<1x1x1x16xf32>
    %12 = vector.shape_cast %11 : vector<1x1x1x16xf32> to vector<1x16xf32>
    %cst_7 = arith.constant 0.000000e+00 : f32
    %13 = vector.broadcast %cst_7 : f32 to vector<1x16xf32>
    %14 = arith.select %10, %12, %13 : vector<1x16xf32>
    %15 = vector.extract_strided_slice %9 {offsets = [0, 0], sizes = [15, 16], strides = [1, 1]} : vector<16x16xf32> to vector<15x16xf32>
    %16 = tpu.concatenate %14, %15 in 0 : vector<1x16xf32>, vector<15x16xf32> -> vector<16x16xf32>
    %cst_8 = arith.constant 0.000000e+00 : f32
    %17 = vector.broadcast %cst_8 : f32 to vector<16x1xf32>
    %18 = tpu.concatenate %9, %17 in 1 : vector<16x16xf32>, vector<16x1xf32> -> vector<16x17xf32>
    %19 = tpu.concatenate %17, %9 in 1 : vector<16x1xf32>, vector<16x16xf32> -> vector<16x17xf32>
    %20 = tpu.concatenate %16, %17 in 1 : vector<16x16xf32>, vector<16x1xf32> -> vector<16x17xf32>
    %21 = arith.subf %18, %19 : vector<16x17xf32>
    %22 = math.absf %21 : vector<16x17xf32>
    %23 = arith.subf %18, %20 : vector<16x17xf32>
    %24 = math.absf %23 : vector<16x17xf32>
    %25 = vector.shape_cast %22 : vector<16x17xf32> to vector<1x16x17xf32>
    %cst_9 = arith.constant dense<0x7F800000> : vector<1xf32>
    %26 = vector.multi_reduction <minimumf>, %25, %cst_9 [1, 2] : vector<1x16x17xf32> to vector<1xf32>
    %27 = vector.shape_cast %26 : vector<1xf32> to vector<1x1x1xf32>
    %28 = vector.extract %27[0, 0, 0] : f32 from vector<1x1x1xf32>
    %29 = vector.broadcast %28 : f32 to vector<1x128xf32>
    %c0_10 = arith.constant 0 : index
    %c0_11 = arith.constant 0 : index
    %c0_12 = arith.constant 0 : index
    %c0_13 = arith.constant 0 : index
    %30 = vector.load %arg4[%c0_10, %c0_11, %c0_12, %c0_13] : memref<1x1x4x128xf32, #tpu.memory_space<vmem>>, vector<1x1x1x128xf32>
    %31 = vector.shape_cast %30 : vector<1x1x1x128xf32> to vector<1x128xf32>
    %32 = vector.shape_cast %29 : vector<1x128xf32> to vector<1x1x1x128xf32>
    tpu.vector_store %arg4[%c0_10, %c0_11, %c0_12, %c0_13], %32 {strides = array<i32>} : memref<1x1x4x128xf32, #tpu.memory_space<vmem>>, vector<1x1x1x128xf32>,
    %33 = vector.shape_cast %22 : vector<16x17xf32> to vector<1x16x17xf32>
    %cst_14 = arith.constant dense<0xFF800000> : vector<1xf32>
    %34 = vector.multi_reduction <maximumf>, %33, %cst_14 [1, 2] : vector<1x16x17xf32> to vector<1xf32>
    %35 = vector.shape_cast %34 : vector<1xf32> to vector<1x1x1xf32>
    %36 = vector.extract %35[0, 0, 0] : f32 from vector<1x1x1xf32>
    %37 = vector.broadcast %36 : f32 to vector<1x128xf32>
    %c0_15 = arith.constant 0 : index
    %c0_16 = arith.constant 0 : index
    %c1 = arith.constant 1 : index
    %c0_17 = arith.constant 0 : index
    %38 = vector.load %arg4[%c0_15, %c0_16, %c1, %c0_17] : memref<1x1x4x128xf32, #tpu.memory_space<vmem>>, vector<1x1x1x128xf32>
    %39 = vector.shape_cast %38 : vector<1x1x1x128xf32> to vector<1x128xf32>
    %40 = vector.shape_cast %37 : vector<1x128xf32> to vector<1x1x1x128xf32>
    tpu.vector_store %arg4[%c0_15, %c0_16, %c1, %c0_17], %40 {strides = array<i32>} : memref<1x1x4x128xf32, #tpu.memory_space<vmem>>, vector<1x1x1x128xf32>,
    %41 = vector.shape_cast %24 : vector<16x17xf32> to vector<1x16x17xf32>
    %cst_18 = arith.constant dense<0x7F800000> : vector<1xf32>
    %42 = vector.multi_reduction <minimumf>, %41, %cst_18 [1, 2] : vector<1x16x17xf32> to vector<1xf32>
    %43 = vector.shape_cast %42 : vector<1xf32> to vector<1x1x1xf32>
    %44 = vector.extract %43[0, 0, 0] : f32 from vector<1x1x1xf32>
    %45 = vector.broadcast %44 : f32 to vector<1x128xf32>
    %c0_19 = arith.constant 0 : index
    %c0_20 = arith.constant 0 : index
    %c2 = arith.constant 2 : index
    %c0_21 = arith.constant 0 : index
    %46 = vector.load %arg4[%c0_19, %c0_20, %c2, %c0_21] : memref<1x1x4x128xf32, #tpu.memory_space<vmem>>, vector<1x1x1x128xf32>
    %47 = vector.shape_cast %46 : vector<1x1x1x128xf32> to vector<1x128xf32>
    %48 = vector.shape_cast %45 : vector<1x128xf32> to vector<1x1x1x128xf32>
    tpu.vector_store %arg4[%c0_19, %c0_20, %c2, %c0_21], %48 {strides = array<i32>} : memref<1x1x4x128xf32, #tpu.memory_space<vmem>>, vector<1x1x1x128xf32>,
    %49 = vector.shape_cast %24 : vector<16x17xf32> to vector<1x16x17xf32>
    %cst_22 = arith.constant dense<0xFF800000> : vector<1xf32>
    %50 = vector.multi_reduction <maximumf>, %49, %cst_22 [1, 2] : vector<1x16x17xf32> to vector<1xf32>
    %51 = vector.shape_cast %50 : vector<1xf32> to vector<1x1x1xf32>
    %52 = vector.extract %51[0, 0, 0] : f32 from vector<1x1x1xf32>
    %53 = vector.broadcast %52 : f32 to vector<1x128xf32>
    %c0_23 = arith.constant 0 : index
    %c0_24 = arith.constant 0 : index
    %c3 = arith.constant 3 : index
    %c0_25 = arith.constant 0 : index
    %54 = vector.load %arg4[%c0_23, %c0_24, %c3, %c0_25] : memref<1x1x4x128xf32, #tpu.memory_space<vmem>>, vector<1x1x1x128xf32>
    %55 = vector.shape_cast %54 : vector<1x1x1x128xf32> to vector<1x128xf32>
    %56 = vector.shape_cast %53 : vector<1x128xf32> to vector<1x1x1x128xf32>
    tpu.vector_store %arg4[%c0_23, %c0_24, %c3, %c0_25], %56 {strides = array<i32>} : memref<1x1x4x128xf32, #tpu.memory_space<vmem>>, vector<1x1x1x128xf32>,
    return
  }
  func.func @transform_0(%arg0: i32, %arg1: i32) -> (i32, i32, i32, i32) {
    %c0_i32 = arith.constant 0 : i32
    %0 = arith.minsi %arg1, %c0_i32 : i32
    %c0_i32_0 = arith.constant 0 : i32
    %c0_i32_1 = arith.constant 0 : i32
    %c0_i32_2 = arith.constant 0 : i32
    return %arg0, %c0_i32_0, %0, %c0_i32_1 : i32, i32, i32, i32
  }
  func.func @transform_1(%arg0: i32, %arg1: i32) -> (i32, i32, i32, i32) {
    %c2_i32 = arith.constant 2 : i32
    %0 = arith.muli %arg1, %c2_i32 : i32
    %c1_i32 = arith.constant 1 : i32
    %1 = arith.subi %0, %c1_i32 : i32
    %c0_i32 = arith.constant 0 : i32
    %2 = arith.maxsi %1, %c0_i32 : i32
    %c0_i32_0 = arith.constant 0 : i32
    %c0_i32_1 = arith.constant 0 : i32
    %c0_i32_2 = arith.constant 0 : i32
    return %arg0, %c0_i32_0, %2, %c0_i32_1 : i32, i32, i32, i32
  }
  func.func @transform_2(%arg0: i32, %arg1: i32) -> (i32, i32, i32, i32) {
    %c0_i32 = arith.constant 0 : i32
    %c0_i32_0 = arith.constant 0 : i32
    %c0_i32_1 = arith.constant 0 : i32
    return %arg0, %arg1, %c0_i32, %c0_i32_0 : i32, i32, i32, i32
  }
}

module attributes {stable_mosaic.version = 11 : i64} {
  func.func @_norm_kernel(%arg0: i32, %arg1: i32, %arg2: memref<4xf32, #tpu.memory_space<smem>>, %arg3: memref<1x1x16x16xf32, #tpu.memory_space<vmem>>, %arg4: memref<1x1x8x16xf32, #tpu.memory_space<vmem>>, %arg5: memref<1x1x16x17xf32, #tpu.memory_space<vmem>>) attributes {dimension_semantics = [#tpu.dimension_semantics<parallel>, #tpu.dimension_semantics<parallel>], iteration_bounds = array<i64: 2, 2>, scalar_prefetch = 0 : i64, scratch_operands = 0 : i64, tpu.core_type = #tpu.core_type<tc>, window_params = [{transform_indices = @transform_0, window_bounds = array<i64: 4>}, {transform_indices = @transform_1, window_bounds = array<i64: 1, 1, 16, 16>}, {transform_indices = @transform_2, window_bounds = array<i64: 1, 1, 8, 16>}, {transform_indices = @transform_3, window_bounds = array<i64: 1, 1, 16, 17>}]} {
    %0 = tpu.iota {dimensions = array<i32: 0>} : vector<16x16xi32>
    %c16_i32 = arith.constant 16 : i32
    %1 = arith.muli %arg1, %c16_i32 : i32
    %2 = vector.broadcast %1 : i32 to vector<16x16xi32>
    %3 = arith.addi %0, %2 : vector<16x16xi32>
    %c16_i32_0 = arith.constant 16 : i32
    %4 = vector.broadcast %c16_i32_0 : i32 to vector<16x16xi32>
    %5 = arith.cmpi slt, %3, %4 : vector<16x16xi32>
    %c0 = arith.constant 0 : index
    %c0_1 = arith.constant 0 : index
    %c0_2 = arith.constant 0 : index
    %c0_3 = arith.constant 0 : index
    %6 = vector.load %arg3[%c0, %c0_1, %c0_2, %c0_3] : memref<1x1x16x16xf32, #tpu.memory_space<vmem>>, vector<1x1x16x16xf32>
    %7 = vector.shape_cast %6 : vector<1x1x16x16xf32> to vector<16x16xf32>
    %cst = arith.constant 0.000000e+00 : f32
    %8 = vector.broadcast %cst : f32 to vector<16x16xf32>
    %9 = arith.select %5, %7, %8 : vector<16x16xi1>, vector<16x16xf32>
    %c0_i32 = arith.constant 0 : i32
    %10 = arith.cmpi sgt, %arg1, %c0_i32 : i32
    %c0_4 = arith.constant 0 : index
    %c0_5 = arith.constant 0 : index
    %c7 = arith.constant 7 : index
    %c0_6 = arith.constant 0 : index
    %11 = vector.load %arg4[%c0_4, %c0_5, %c7, %c0_6] : memref<1x1x8x16xf32, #tpu.memory_space<vmem>>, vector<1x1x1x16xf32>
    %12 = vector.shape_cast %11 : vector<1x1x1x16xf32> to vector<1x16xf32>
    %cst_7 = arith.constant 0.000000e+00 : f32
    %13 = vector.broadcast %cst_7 : f32 to vector<1x16xf32>
    %14 = arith.select %10, %12, %13 : vector<1x16xf32>
    %15 = vector.extract_strided_slice %9 {offsets = [0, 0], sizes = [15, 16], strides = [1, 1]} : vector<16x16xf32> to vector<15x16xf32>
    %16 = tpu.concatenate %14, %15 in 0 : vector<1x16xf32>, vector<15x16xf32> -> vector<16x16xf32>
    %cst_8 = arith.constant 0.000000e+00 : f32
    %17 = vector.broadcast %cst_8 : f32 to vector<16x1xf32>
    %18 = tpu.concatenate %9, %17 in 1 : vector<16x16xf32>, vector<16x1xf32> -> vector<16x17xf32>
    %19 = tpu.concatenate %17, %9 in 1 : vector<16x1xf32>, vector<16x16xf32> -> vector<16x17xf32>
    %20 = tpu.concatenate %16, %17 in 1 : vector<16x16xf32>, vector<16x1xf32> -> vector<16x17xf32>
    %21 = arith.subf %18, %19 : vector<16x17xf32>
    %22 = math.absf %21 : vector<16x17xf32>
    %23 = arith.subf %18, %20 : vector<16x17xf32>
    %24 = math.absf %23 : vector<16x17xf32>
    %c0_9 = arith.constant 0 : index
    %25 = memref.load %arg2[%c0_9] : memref<4xf32, #tpu.memory_space<smem>>
    %c1 = arith.constant 1 : index
    %26 = memref.load %arg2[%c1] : memref<4xf32, #tpu.memory_space<smem>>
    %c2 = arith.constant 2 : index
    %27 = memref.load %arg2[%c2] : memref<4xf32, #tpu.memory_space<smem>>
    %c3 = arith.constant 3 : index
    %28 = memref.load %arg2[%c3] : memref<4xf32, #tpu.memory_space<smem>>
    %29 = vector.broadcast %25 : f32 to vector<16x17xf32>
    %30 = arith.subf %22, %29 : vector<16x17xf32>
    %31 = vector.broadcast %26 : f32 to vector<16x17xf32>
    %32 = arith.mulf %30, %31 : vector<16x17xf32>
    %33 = vector.broadcast %27 : f32 to vector<16x17xf32>
    %34 = arith.subf %24, %33 : vector<16x17xf32>
    %35 = vector.broadcast %28 : f32 to vector<16x17xf32>
    %36 = arith.mulf %34, %35 : vector<16x17xf32>
    %37 = arith.addf %32, %36 : vector<16x17xf32>
    %c0_10 = arith.constant 0 : index
    %c0_11 = arith.constant 0 : index
    %c0_12 = arith.constant 0 : index
    %c0_13 = arith.constant 0 : index
    %38 = vector.load %arg5[%c0_10, %c0_11, %c0_12, %c0_13] : memref<1x1x16x17xf32, #tpu.memory_space<vmem>>, vector<1x1x16x17xf32>
    %39 = vector.shape_cast %38 : vector<1x1x16x17xf32> to vector<16x17xf32>
    %40 = vector.shape_cast %37 : vector<16x17xf32> to vector<1x1x16x17xf32>
    tpu.vector_store %arg5[%c0_10, %c0_11, %c0_12, %c0_13], %40 {strides = array<i32>} : memref<1x1x16x17xf32, #tpu.memory_space<vmem>>, vector<1x1x16x17xf32>,
    return
  }
  func.func @transform_0(%arg0: i32, %arg1: i32) -> i32 {
    %c0_i32 = arith.constant 0 : i32
    %c0_i32_0 = arith.constant 0 : i32
    return %c0_i32 : i32
  }
  func.func @transform_1(%arg0: i32, %arg1: i32) -> (i32, i32, i32, i32) {
    %c0_i32 = arith.constant 0 : i32
    %0 = arith.minsi %arg1, %c0_i32 : i32
    %c0_i32_0 = arith.constant 0 : i32
    %c0_i32_1 = arith.constant 0 : i32
    %c0_i32_2 = arith.constant 0 : i32
    return %arg0, %c0_i32_0, %0, %c0_i32_1 : i32, i32, i32, i32
  }
  func.func @transform_2(%arg0: i32, %arg1: i32) -> (i32, i32, i32, i32) {
    %c2_i32 = arith.constant 2 : i32
    %0 = arith.muli %arg1, %c2_i32 : i32
    %c1_i32 = arith.constant 1 : i32
    %1 = arith.subi %0, %c1_i32 : i32
    %c0_i32 = arith.constant 0 : i32
    %2 = arith.maxsi %1, %c0_i32 : i32
    %c0_i32_0 = arith.constant 0 : i32
    %c0_i32_1 = arith.constant 0 : i32
    %c0_i32_2 = arith.constant 0 : i32
    return %arg0, %c0_i32_0, %2, %c0_i32_1 : i32, i32, i32, i32
  }
  func.func @transform_3(%arg0: i32, %arg1: i32) -> (i32, i32, i32, i32) {
    %c0_i32 = arith.constant 0 : i32
    %c0_i32_0 = arith.constant 0 : i32
    %c0_i32_1 = arith.constant 0 : i32
    return %arg0, %c0_i32, %arg1, %c0_i32_0 : i32, i32, i32, i32
  }
}

</mosaic_0001>

<llo_original>
// kernel: sobel_layer.2
$region0: #{sobel_layer.2}
  #allocation0 [shape = 'u32[]', space=smem, size = 0x4, offset = 0x4, fixed_abs, tag = 'smem constant byte address 0x4 - core index']
  #allocation1 [shape = 'u32[144,128]{1,0:T(1,128)}', space=vmem, size = 0x12000, scoped, tag = 'internal scratch']
  %s0 = inlined_call_operand.hbm [shape: f32[2,1,16,16], index: 0, kind: input, shape index: {}, may-alias: {0,1}]
  %s1 = inlined_call_operand.hbm [shape: f32[2,1,16,16], index: 1, kind: input, shape index: {}, may-alias: {0,1}]
  %s2 = inlined_call_operand.vmem [shape: f32[2,2,4,128], index: 2, kind: output, shape index: {}]
  %s3 = sld [smem:[#allocation0]]
  $region49: #{sobel_layer.2} parent=0
    _
  %s5 = ssub.s32 1, %s3
  %s6 = scalar_select 0, %s5, %s3
  $region1: #{sobel_layer.2} parent=0
    #allocation2 [shape = 'u8[16384]{0}', space=vmem, size = 0x4000, scoped, tag = 'input window, operand 0']
    #allocation3 [shape = 's32[2]{0}', space=sflag, size = 0x8, scoped, tag = 'scoped memory for sobel_layer.2']
    #allocation4 [shape = 'u8[8192]{0}', space=vmem, size = 0x2000, scoped, tag = 'input window, operand 1']
    #allocation5 [shape = 's32[2]{0}', space=sflag, size = 0x8, scoped, tag = 'scoped memory for sobel_layer.2']
    %7 = vsyncpa [#allocation3], 0
    %s8 = scalar_lea.sflag [#allocation3], 1
    %9 = vsyncpa %s8, 0
    %10 = vsyncpa [#allocation5], 0
    %s11 = scalar_lea.sflag [#allocation5], 1
    %12 = vsyncpa %s11, 0
    loop: start=0, step=1, limit=6
    $region2: #{sobel_layer.2} parent=1 // loop_pre_header
      _
    $region3: #{sobel_layer.2} parent=1 // loop_header
      %s14 = sphi 0, %s18
      %p15 = scmp.ge.s32.totalorder %s14, 6
      %s21 = sphi 0, %s33
      %s22 = sphi 0, %s29
      %s23 = sphi 0, %s21
      %s24 = sphi 0, %s22
      %s25 = sphi 0, %s23
      %s26 = sphi 0, %s24
      %s42 = sphi 0, %s44
      %s45 = sphi 0, %s42
      %s46 = sphi 0, %s45
      %s62 = sphi 0, %s46
      %s78 = sphi 0, %s80
      %s81 = sphi 0, %s78
      %s82 = sphi 0, %s81
      %s98 = sphi 0, %s82
      %s106 = sphi 0, %s108
      %s109 = sphi 0, %s106
      %s110 = sphi 0, %s109
      %s126 = sphi 0, %s110
    $region4: #{sobel_layer.2} parent=1 // loop_header_branch
      %17 = sbr.rel (%p15) target = $region8
    $region5: #{sobel_layer.2} parent=1 // loop_body
      %s19 = ssub.s32 %s14, 1
      %s20 = ssub.s32 %s14, 2
      %s27 = sadd.s32 1, %s22
      %p28 = scmp.ge.s32.totalorder %s27, 2
      %s29 = scalar_select %p28, 0, %s27
      %s30 = sadd.s32 1, %s21
      %s31 = scalar_select %p28, %s30, %s21
      %p32 = scmp.ge.s32.totalorder %s31, 2
      %s33 = scalar_select %p32, 0, %s31
      %p34 = scmp.lt.s32.totalorder %s22, 0
      %s35 = scalar_select %p34, %s22, 0
      %p36 = scmp.lt.s32.totalorder %s29, 0
      %s37 = scalar_select %p36, %s29, 0
      %s38 = ssub.s32 %s21, %s33
      %s39 = ssub.s32 %s35, %s37
      %s40 = sor.u32 %s38, %s39
      %p41 = scmp.eq.s32.totalorder %s40, 0
      %s43 = sadd.s32 %s42, 1
      %s44 = scalar_select %p41, %s42, %s43
      %p47 = pneg %p41
      %p48 = scmp.eq.s32.totalorder %s14, 3
      %p49 = por %p47, %p48
      %p50 = scmp.ne.s32.totalorder %s42, %s45
      %p51 = scmp.eq.s32.totalorder %s14, 0
      %p52 = por %p50, %p51
      %p53 = scmp.ne.s32.totalorder %s42, %s45
      %p54 = scmp.eq.s32.totalorder %s19, 3
      %p55 = por %p53, %p54
      %p56 = scmp.ne.s32.totalorder %s45, %s46
      %p57 = scmp.eq.s32.totalorder %s19, 0
      %p58 = por %p56, %p57
      %p59 = scmp.ne.s32.totalorder %s45, %s46
      %p60 = scmp.eq.s32.totalorder %s20, 3
      %p61 = por %p59, %p60
      %p63 = scmp.ne.s32.totalorder %s46, %s62
      %p64 = scmp.eq.s32.totalorder %s20, 0
      %p65 = por %p63, %p64
      %s66 = smul.u32 %s22, 2
      %s67 = ssub.s32 %s66, 1
      %p68 = scmp.gt.s32.totalorder %s67, 0
      %s69 = scalar_select %p68, %s67, 0
      %s70 = smul.u32 %s29, 2
      %s71 = ssub.s32 %s70, 1
      %p72 = scmp.gt.s32.totalorder %s71, 0
      %s73 = scalar_select %p72, %s71, 0
      %s74 = ssub.s32 %s21, %s33
      %s75 = ssub.s32 %s69, %s73
      %s76 = sor.u32 %s74, %s75
      %p77 = scmp.eq.s32.totalorder %s76, 0
      %s79 = sadd.s32 %s78, 1
      %s80 = scalar_select %p77, %s78, %s79
      %p83 = pneg %p77
      %p84 = scmp.eq.s32.totalorder %s14, 3
      %p85 = por %p83, %p84
      %p86 = scmp.ne.s32.totalorder %s78, %s81
      %p87 = scmp.eq.s32.totalorder %s14, 0
      %p88 = por %p86, %p87
      %p89 = scmp.ne.s32.totalorder %s78, %s81
      %p90 = scmp.eq.s32.totalorder %s19, 3
      %p91 = por %p89, %p90
      %p92 = scmp.ne.s32.totalorder %s81, %s82
      %p93 = scmp.eq.s32.totalorder %s19, 0
      %p94 = por %p92, %p93
      %p95 = scmp.ne.s32.totalorder %s81, %s82
      %p96 = scmp.eq.s32.totalorder %s20, 3
      %p97 = por %p95, %p96
      %p99 = scmp.ne.s32.totalorder %s82, %s98
      %p100 = scmp.eq.s32.totalorder %s20, 0
      %p101 = por %p99, %p100
      %s102 = ssub.s32 %s21, %s33
      %s103 = ssub.s32 %s22, %s29
      %s104 = sor.u32 %s102, %s103
      %p105 = scmp.eq.s32.totalorder %s104, 0
      %s107 = sadd.s32 %s106, 1
      %s108 = scalar_select %p105, %s106, %s107
      %p111 = pneg %p105
      %p112 = scmp.eq.s32.totalorder %s14, 3
      %p113 = por %p111, %p112
      %p114 = scmp.ne.s32.totalorder %s106, %s109
      %p115 = scmp.eq.s32.totalorder %s14, 0
      %p116 = por %p114, %p115
      %p117 = scmp.ne.s32.totalorder %s106, %s109
      %p118 = scmp.eq.s32.totalorder %s19, 3
      %p119 = por %p117, %p118
      %p120 = scmp.ne.s32.totalorder %s109, %s110
      %p121 = scmp.eq.s32.totalorder %s19, 0
      %p122 = por %p120, %p121
      %p123 = scmp.ne.s32.totalorder %s109, %s110
      %p124 = scmp.eq.s32.totalorder %s20, 3
      %p125 = por %p123, %p124
      %p127 = scmp.ne.s32.totalorder %s110, %s126
      %p128 = scmp.eq.s32.totalorder %s20, 0
      %p129 = por %p127, %p128
      %p130 = scmp.le.s32.totalorder 1, %s14
      %p131 = scmp.lt.s32.totalorder %s14, 5
      %p132 = pnand %p130, %p131
      %p133 = pneg %p132
      // Predicated region
      $region9: #{sobel_layer.2} parent=5 // pred_check
        _
      $region10: #{sobel_layer.2} parent=5 // pred_check_branch
        %135 = sbr.rel (%p132) target = $region12
      $region11: #{sobel_layer.2} parent=5 // pred_region
        %s136 = ssub.s32 %s14, 1
      $region12: #{sobel_layer.2} parent=5 // pred_fallthru
        _
      %p137 = scmp.lt.s32.totalorder %s14, 4
      // Predicated region
      $region13: #{sobel_layer.2} parent=5 // pred_check
        %p138 = pneg %p137
      $region14: #{sobel_layer.2} parent=5 // pred_check_branch
        %140 = sbr.rel (%p138) target = $region16
      $region15: #{sobel_layer.2} parent=5 // pred_region
        // Predicated region
        $region17: #{sobel_layer.2} parent=15 // pred_check
          %p141 = pneg %p52
        $region18: #{sobel_layer.2} parent=15 // pred_check_branch
          %143 = sbr.rel (%p141) target = $region20
        $region19: #{sobel_layer.2} parent=15 // pred_region
          %s144 = sand.u32 %s42, 1
          %s145 = scalar_lea.sflag [#allocation3], %s144
          %s146 = sand.u32 %s42, 1
          %s147 = smul.addr %s146, 16
          %s148 = scalar_lea.vmem [#allocation2], %s147
          %p149 = scmp.lt.s32.totalorder %s22, 0
          %s150 = scalar_select %p149, %s22, 0
          %s151 = smul.u32 2, %s150
          %s153 = ssub.s32 256, 256
          %154 = vsyncadd %s145, %s153
          %s155 = smul.addr %s21, 2
          %s156 = sadd.s32 %s151, %s155
          %s157 = smul.addr %s156, 128
          %s158 = scalar_lea.hbm %s0, %s157
          %s159 = sshll.u32 %s148, 4
          %s160 = int_to_ptr.vmem [resolvable:$true] %s159
          %165 = dma.hbm_to_vmem [thread:$0]  %s158, 256, %s160, %s145, 128, 128, 8
        $region20: #{sobel_layer.2} parent=15 // pred_fallthru
          _
        // Predicated region
        $region21: #{sobel_layer.2} parent=15 // pred_check
          %p166 = pneg %p88
        $region22: #{sobel_layer.2} parent=15 // pred_check_branch
          %168 = sbr.rel (%p166) target = $region24
        $region23: #{sobel_layer.2} parent=15 // pred_region
          %s169 = sand.u32 %s78, 1
          %s170 = scalar_lea.sflag [#allocation5], %s169
          %s171 = sand.u32 %s78, 1
          %s172 = smul.addr %s171, 8
          %s173 = scalar_lea.vmem [#allocation4], %s172
          %s174 = smul.u32 %s22, 2
          %s175 = ssub.s32 %s174, 1
          %p176 = scmp.gt.s32.totalorder %s175, 0
          %s177 = scalar_select %p176, %s175, 0
          %s179 = ssub.s32 128, 128
          %180 = vsyncadd %s170, %s179
          %s181 = smul.addr %s21, 2
          %s182 = sadd.s32 %s177, %s181
          %s183 = smul.addr %s182, 128
          %s184 = scalar_lea.hbm %s1, %s183
          %s186 = sshll.u32 %s173, 4
          %s187 = int_to_ptr.vmem [resolvable:$true] %s186
          %189 = dma.hbm_to_vmem [thread:$0]  %s184, 128, %s187, %s170
        $region24: #{sobel_layer.2} parent=15 // pred_fallthru
          _
      $region16: #{sobel_layer.2} parent=5 // pred_fallthru
        _
      %p190 = scmp.le.s32.totalorder 1, %s14
      %p191 = scmp.lt.s32.totalorder %s14, 5
      %p192 = pnand %p190, %p191
      %p193 = pneg %p192
      // Predicated region
      $region25: #{sobel_layer.2} parent=5 // pred_check
        _
      $region26: #{sobel_layer.2} parent=5 // pred_check_branch
        %195 = sbr.rel (%p192) target = $region28
      $region27: #{sobel_layer.2} parent=5 // pred_region
        %s196 = ssub.s32 %s14, 1
        %s197 = sand.u32 %s45, 1
        %s198 = scalar_lea.sflag [#allocation3], %s197
        %s199 = sand.u32 %s45, 1
        %s200 = smul.addr %s199, 16
        %s201 = scalar_lea.vmem [#allocation2], %s200
        // Predicated region
        $region29: #{sobel_layer.2} parent=27 // pred_check
          %p202 = pneg %p58
        $region30: #{sobel_layer.2} parent=27 // pred_check_branch
          %204 = sbr.rel (%p202) target = $region32
        $region31: #{sobel_layer.2} parent=27 // pred_region
          %205 = dma.done %s198, 256
        $region32: #{sobel_layer.2} parent=27 // pred_fallthru
          _
        %s206 = sand.u32 %s81, 1
        %s207 = scalar_lea.sflag [#allocation5], %s206
        %s208 = sand.u32 %s81, 1
        %s209 = smul.addr %s208, 8
        %s210 = scalar_lea.vmem [#allocation4], %s209
        // Predicated region
        $region33: #{sobel_layer.2} parent=27 // pred_check
          %p211 = pneg %p94
        $region34: #{sobel_layer.2} parent=27 // pred_check_branch
          %213 = sbr.rel (%p211) target = $region36
        $region35: #{sobel_layer.2} parent=27 // pred_region
          %214 = dma.done %s207, 128
        $region36: #{sobel_layer.2} parent=27 // pred_fallthru
          _
        %s215 = sand.u32 %s45, 1
        %s216 = scalar_lea.sflag [#allocation3], %s215
        %s217 = sand.u32 %s45, 1
        %s218 = smul.addr %s217, 16
        %s219 = scalar_lea.vmem [#allocation2], %s218
        %p220 = pneg %p58
        %p221 = pneg %p55
        %s222 = sand.u32 %s81, 1
        %s223 = scalar_lea.sflag [#allocation5], %s222
        %s224 = sand.u32 %s81, 1
        %s225 = smul.addr %s224, 8
        %s226 = scalar_lea.vmem [#allocation4], %s225
        %p227 = pneg %p94
        %p228 = pneg %p91
        %p229 = pneg %p122
        %p230 = pneg %p119
        %p231 = scmp.lt.s32.totalorder %s23, 1
        %s232 = scalar_select %p231, %s23, 1
        %p233 = scmp.lt.s32.totalorder %s24, 1
        %s234 = scalar_select %p233, %s24, 1
        %s235 = smul.addr %s232, 2
        %s236 = sadd.s32 %s234, %s235
        %s237 = smul.addr %s236, 4
        %s238 = scalar_lea.vmem %s2, %s237
        %p239 = scmp.lt.s32.totalorder %s24, 0
        %s240 = scalar_select %p239, %s24, 0
        %s241 = smul.u32 2, %s240
        %s242 = smul.u32 %s24, 2
        %s243 = ssub.s32 %s242, 1
        %p244 = scmp.gt.s32.totalorder %s243, 0
        %s245 = scalar_select %p244, %s243, 0
        %p246 = scmp.lt.s32.totalorder %s23, 1
        %s247 = scalar_select %p246, %s23, 1
        %p248 = scmp.lt.s32.totalorder %s24, 1
        %s249 = scalar_select %p248, %s24, 1
        %s250 = smul.addr %s247, 2
        %s251 = sadd.s32 %s249, %s250
        %s252 = smul.addr %s251, 4
        %s253 = scalar_lea.vmem %s2, %s252
        %v254 = vlaneseq
        %v255 = vshrl.u32 %v254, 7
        %v256 = vadd.s32 %v255, 8
        %s257 = smul.u32 %s24, 16
        %v258 = vstv %s257
        %v259 = vadd.s32 %v255, %v258
        %v260 = vadd.s32 %v256, %v258
        %vm261 = vcmp.lt.s32.totalorder %v259, 16
        %vm262 = vcmp.lt.s32.totalorder %v260, 16
        %v263 = vld [vmem:[%s201] sm:$0xff]
        %v264 = vld [vmem:[%s201 + $0x8] sm:$0xff]
        %v265 = vsel %vm261, %v263, 0.0
        %v266 = vsel %vm262, %v264, 0.0
        %p267 = scmp.gt.s32.totalorder %s24, 0
        %v268 = vld [vmem:[%s210 + $0x7] sm:$0x1]
        %s269 = scalar_select %p267, 1, 0
        %v270 = vstv %s269
        %vm271 = vcmp.eq.s32.totalorder %v270, 1
        %v272 = vsel %vm271, %v268, 0.0
        %vm275 = vcmask 1040384
        %v276 = vrot.slane %v265, 7
        %v277 = vrot.slane %v266, 7
        %v278 = vsel %vm275, %v276, %v277
        %v281 = vsel %vm275, %v272, %v276
        %vm282 = vcmask 130048
        %v283 = vsel %vm282, %v265, 0.0
        %v284 = vsel %vm282, %v266, 0.0
        %285 = vrot.lane.b32.xlu0 %v265, 1
        %v286 = vpop.permute.xlu0 %285
        %287 = vrot.lane.b32.xlu0 %v266, 1
        %v288 = vpop.permute.xlu0 %287
        %vm291 = vcmask 7168
        %v292 = vsel %vm291, 0.0, %v286
        %v293 = vsel %vm291, 0.0, %v288
        %v294 = vsel %vm282, %v281, 0.0
        %v295 = vsel %vm282, %v278, 0.0
        %v296 = vsub.f32 %v283, %v292
        %v297 = vsub.f32 %v284, %v293
        %v298 = vand.u32 2147483647, %v296
        %v299 = vand.u32 2147483647, %v297
        %v300 = vsub.f32 %v283, %v294
        %v301 = vsub.f32 %v284, %v295
        %v302 = vand.u32 2147483647, %v300
        %v303 = vand.u32 2147483647, %v301
        %vm304 = vcmask 138240
        %v305 = vsel %vm304, %v298, inf
        %v306 = vsel %vm304, %v299, inf
        %v307 = vmin.f32 %v305, %v306
        %308 = vmin.xlane.f32.xlu0 %v307
        %v309 = vpop.xlane.xlu0 %308
        %v310 = vrot.slane %v309, 4
        %v311 = vmin.f32 %v309, %v310
        %v312 = vrot.slane %v311, 2
        %v313 = vmin.f32 %v311, %v312
        %v314 = vrot.slane %v313, 1
        %v315 = vmin.f32 %v313, %v314
        %s316 = vtos %v315
        %v317 = vstv %s316
        %318 = vst [vmem:[%s253] sm:$0x1] %v317
        %v319 = vsel %vm304, %v298, -inf
        %v320 = vsel %vm304, %v299, -inf
        %v321 = vmax.f32 %v319, %v320
        %322 = vmax.xlane.f32.xlu0 %v321
        %v323 = vpop.xlane.xlu0 %322
        %v324 = vrot.slane %v323, 4
        %v325 = vmax.f32 %v323, %v324
        %v326 = vrot.slane %v325, 2
        %v327 = vmax.f32 %v325, %v326
        %v328 = vrot.slane %v327, 1
        %v329 = vmax.f32 %v327, %v328
        %s330 = vtos %v329
        %v331 = vstv %s330
        %332 = vst [vmem:[%s253 + $0x1] sm:$0x1] %v331
        %v333 = vsel %vm304, %v302, inf
        %v334 = vsel %vm304, %v303, inf
        %v335 = vmin.f32 %v333, %v334
        %336 = vmin.xlane.f32.xlu0 %v335
        %v337 = vpop.xlane.xlu0 %336
        %v338 = vrot.slane %v337, 4
        %v339 = vmin.f32 %v337, %v338
        %v340 = vrot.slane %v339, 2
        %v341 = vmin.f32 %v339, %v340
        %v342 = vrot.slane %v341, 1
        %v343 = vmin.f32 %v341, %v342
        %s344 = vtos %v343
        %v345 = vstv %s344
        %346 = vst [vmem:[%s253 + $0x2] sm:$0x1] %v345
        %v347 = vsel %vm304, %v302, -inf
        %v348 = vsel %vm304, %v303, -inf
        %v349 = vmax.f32 %v347, %v348
        %350 = vmax.xlane.f32.xlu0 %v349
        %v351 = vpop.xlane.xlu0 %350
        %v352 = vrot.slane %v351, 4
        %v353 = vmax.f32 %v351, %v352
        %v354 = vrot.slane %v353, 2
        %v355 = vmax.f32 %v353, %v354
        %v356 = vrot.slane %v355, 1
        %v357 = vmax.f32 %v355, %v356
        %s358 = vtos %v357
        %v359 = vstv %s358
        %360 = vst [vmem:[%s253 + $0x3] sm:$0x1] %v359
        %p361 = scmp.lt.s32.totalorder %s23, 1
        %s362 = scalar_select %p361, %s23, 1
        %p363 = scmp.lt.s32.totalorder %s24, 1
        %s364 = scalar_select %p363, %s24, 1
        %s365 = smul.addr %s362, 2
        %s366 = sadd.s32 %s364, %s365
        %s367 = smul.addr %s366, 4
        %s368 = scalar_lea.vmem %s2, %s367
        // Predicated region
        $region37: #{sobel_layer.2} parent=27 // pred_check
          %p369 = pneg %p119
        $region38: #{sobel_layer.2} parent=27 // pred_check_branch
          %371 = sbr.rel (%p369) target = $region40
        $region39: #{sobel_layer.2} parent=27 // pred_region
          _
        $region40: #{sobel_layer.2} parent=27 // pred_fallthru
          _
      $region28: #{sobel_layer.2} parent=5 // pred_fallthru
        _
      %p372 = scmp.le.s32.totalorder 2, %s14
      // Predicated region
      $region41: #{sobel_layer.2} parent=5 // pred_check
        %p373 = pneg %p372
      $region42: #{sobel_layer.2} parent=5 // pred_check_branch
        %375 = sbr.rel (%p373) target = $region44
      $region43: #{sobel_layer.2} parent=5 // pred_region
        %s376 = ssub.s32 %s14, 2
        // Predicated region
        $region45: #{sobel_layer.2} parent=43 // pred_check
          %p377 = pneg %p125
        $region46: #{sobel_layer.2} parent=43 // pred_check_branch
          %379 = sbr.rel (%p377) target = $region48
        $region47: #{sobel_layer.2} parent=43 // pred_region
          %p380 = scmp.lt.s32.totalorder %s25, 1
          %s381 = scalar_select %p380, %s25, 1
          %p382 = scmp.lt.s32.totalorder %s26, 1
          %s383 = scalar_select %p382, %s26, 1
          %s384 = smul.addr %s381, 2
          %s385 = sadd.s32 %s383, %s384
          %s386 = smul.addr %s385, 4
          %s387 = scalar_lea.vmem %s2, %s386
        $region48: #{sobel_layer.2} parent=43 // pred_fallthru
          _
      $region44: #{sobel_layer.2} parent=5 // pred_fallthru
        _
    $region6: #{sobel_layer.2} parent=1 // loop_footer
      %s18 = sadd.s32 1, %s14
    $region7: #{sobel_layer.2} parent=1 // loop_footer_branch
      %13 = sbr.rel target = $region3
    $region8: #{sobel_layer.2} parent=1 // loop_exit
      _
    %388 = vsyncpa [#allocation3], 1
    %s389 = scalar_lea.sflag [#allocation3], 1
    %390 = vsyncpa %s389, 1
    %391 = vsyncpa [#allocation5], 1
    %s392 = scalar_lea.sflag [#allocation5], 1
    %393 = vsyncpa %s392, 1

// kernel: sobel_layer.3
$region0: #{sobel_layer.3}
  #allocation0 [shape = 'u32[]', space=smem, size = 0x4, offset = 0x4, fixed_abs, tag = 'smem constant byte address 0x4 - core index']
  #allocation1 [shape = 'u32[144,128]{1,0:T(1,128)}', space=vmem, size = 0x12000, scoped, tag = 'internal scratch']
  %s0 = inlined_call_operand.vmem [shape: f32[4], index: 0, kind: input, shape index: {}]
  %s1 = inlined_call_operand.vmem [shape: f32[2,1,16,16], index: 1, kind: input, shape index: {}, may-alias: {1,2}]
  %s2 = inlined_call_operand.vmem [shape: f32[2,1,16,16], index: 2, kind: input, shape index: {}, may-alias: {1,2}]
  %s3 = inlined_call_operand.vmem [shape: f32[2,1,17,17], index: 3, kind: output, shape index: {}]
  %s4 = sld [smem:[#allocation0]]
  $region97: #{sobel_layer.3} parent=0
    _
  %s6 = ssub.s32 1, %s4
  %s7 = scalar_select 0, %s6, %s4
  $region1: #{sobel_layer.3} parent=0
    #allocation2 [shape = 'u8[512]{0}', space=smem, size = 0x200, scoped, tag = 'input window, operand 0, single buffered']
    #allocation3 [shape = 's32[2]{0}', space=sflag, size = 0x8, scoped, tag = 'scoped memory for sobel_layer.3']
    #allocation4 [shape = 'u8[16384]{0}', space=vmem, size = 0x4000, scoped, tag = 'output window, operand 0']
    %8 = vsyncpa [#allocation3], 0
    loop: start=0, step=1, limit=6
    $region2: #{sobel_layer.3} parent=1 // loop_pre_header
      _
    $region3: #{sobel_layer.3} parent=1 // loop_header
      %s10 = sphi 0, %s14
      %p11 = scmp.ge.s32.totalorder %s10, 6
      %s17 = sphi 0, %s29
      %s18 = sphi 0, %s25
      %s19 = sphi 0, %s17
      %s20 = sphi 0, %s18
      %s21 = sphi 0, %s19
      %s22 = sphi 0, %s20
      %s30 = sphi 0, %s30
      %s32 = sphi 0, %s30
      %s33 = sphi 0, %s32
      %s47 = sphi 0, %s33
      %s59 = sphi 0, %s61
      %s62 = sphi 0, %s59
      %s63 = sphi 0, %s62
      %s79 = sphi 0, %s63
      %s95 = sphi 0, %s97
      %s98 = sphi 0, %s95
      %s99 = sphi 0, %s98
      %s115 = sphi 0, %s99
      %s123 = sphi 0, %s125
      %s126 = sphi 0, %s123
      %s127 = sphi 0, %s126
      %s143 = sphi 0, %s127
    $region4: #{sobel_layer.3} parent=1 // loop_header_branch
      %13 = sbr.rel (%p11) target = $region8
    $region5: #{sobel_layer.3} parent=1 // loop_body
      %s15 = ssub.s32 %s10, 1
      %s16 = ssub.s32 %s10, 2
      %s23 = sadd.s32 1, %s18
      %p24 = scmp.ge.s32.totalorder %s23, 2
      %s25 = scalar_select %p24, 0, %s23
      %s26 = sadd.s32 1, %s17
      %s27 = scalar_select %p24, %s26, %s17
      %p28 = scmp.ge.s32.totalorder %s27, 2
      %s29 = scalar_select %p28, 0, %s27
      %s31 = sadd.s32 %s30, 1
      %p34 = scmp.eq.s32.totalorder %s10, 3
      %p35 = scmp.ne.s32.totalorder %s30, %s32
      %p36 = scmp.eq.s32.totalorder %s10, 0
      %p37 = por %p35, %p36
      %p38 = scmp.ne.s32.totalorder %s30, %s32
      %p39 = scmp.eq.s32.totalorder %s15, 3
      %p40 = por %p38, %p39
      %p41 = scmp.ne.s32.totalorder %s32, %s33
      %p42 = scmp.eq.s32.totalorder %s15, 0
      %p43 = por %p41, %p42
      %p44 = scmp.ne.s32.totalorder %s32, %s33
      %p45 = scmp.eq.s32.totalorder %s16, 3
      %p46 = por %p44, %p45
      %p48 = scmp.ne.s32.totalorder %s33, %s47
      %p49 = scmp.eq.s32.totalorder %s16, 0
      %p50 = por %p48, %p49
      %p51 = scmp.lt.s32.totalorder %s18, 0
      %s52 = scalar_select %p51, %s18, 0
      %p53 = scmp.lt.s32.totalorder %s25, 0
      %s54 = scalar_select %p53, %s25, 0
      %s55 = ssub.s32 %s17, %s29
      %s56 = ssub.s32 %s52, %s54
      %s57 = sor.u32 %s55, %s56
      %p58 = scmp.eq.s32.totalorder %s57, 0
      %s60 = sadd.s32 %s59, 1
      %s61 = scalar_select %p58, %s59, %s60
      %p64 = pneg %p58
      %p65 = scmp.eq.s32.totalorder %s10, 3
      %p66 = por %p64, %p65
      %p67 = scmp.ne.s32.totalorder %s59, %s62
      %p68 = scmp.eq.s32.totalorder %s10, 0
      %p69 = por %p67, %p68
      %p70 = scmp.ne.s32.totalorder %s59, %s62
      %p71 = scmp.eq.s32.totalorder %s15, 3
      %p72 = por %p70, %p71
      %p73 = scmp.ne.s32.totalorder %s62, %s63
      %p74 = scmp.eq.s32.totalorder %s15, 0
      %p75 = por %p73, %p74
      %p76 = scmp.ne.s32.totalorder %s62, %s63
      %p77 = scmp.eq.s32.totalorder %s16, 3
      %p78 = por %p76, %p77
      %p80 = scmp.ne.s32.totalorder %s63, %s79
      %p81 = scmp.eq.s32.totalorder %s16, 0
      %p82 = por %p80, %p81
      %s83 = smul.u32 %s18, 2
      %s84 = ssub.s32 %s83, 1
      %p85 = scmp.gt.s32.totalorder %s84, 0
      %s86 = scalar_select %p85, %s84, 0
      %s87 = smul.u32 %s25, 2
      %s88 = ssub.s32 %s87, 1
      %p89 = scmp.gt.s32.totalorder %s88, 0
      %s90 = scalar_select %p89, %s88, 0
      %s91 = ssub.s32 %s17, %s29
      %s92 = ssub.s32 %s86, %s90
      %s93 = sor.u32 %s91, %s92
      %p94 = scmp.eq.s32.totalorder %s93, 0
      %s96 = sadd.s32 %s95, 1
      %s97 = scalar_select %p94, %s95, %s96
      %p100 = pneg %p94
      %p101 = scmp.eq.s32.totalorder %s10, 3
      %p102 = por %p100, %p101
      %p103 = scmp.ne.s32.totalorder %s95, %s98
      %p104 = scmp.eq.s32.totalorder %s10, 0
      %p105 = por %p103, %p104
      %p106 = scmp.ne.s32.totalorder %s95, %s98
      %p107 = scmp.eq.s32.totalorder %s15, 3
      %p108 = por %p106, %p107
      %p109 = scmp.ne.s32.totalorder %s98, %s99
      %p110 = scmp.eq.s32.totalorder %s15, 0
      %p111 = por %p109, %p110
      %p112 = scmp.ne.s32.totalorder %s98, %s99
      %p113 = scmp.eq.s32.totalorder %s16, 3
      %p114 = por %p112, %p113
      %p116 = scmp.ne.s32.totalorder %s99, %s115
      %p117 = scmp.eq.s32.totalorder %s16, 0
      %p118 = por %p116, %p117
      %s119 = ssub.s32 %s17, %s29
      %s120 = ssub.s32 %s18, %s25
      %s121 = sor.u32 %s119, %s120
      %p122 = scmp.eq.s32.totalorder %s121, 0
      %s124 = sadd.s32 %s123, 1
      %s125 = scalar_select %p122, %s123, %s124
      %p128 = pneg %p122
      %p129 = scmp.eq.s32.totalorder %s10, 3
      %p130 = por %p128, %p129
      %p131 = scmp.ne.s32.totalorder %s123, %s126
      %p132 = scmp.eq.s32.totalorder %s10, 0
      %p133 = por %p131, %p132
      %p134 = scmp.ne.s32.totalorder %s123, %s126
      %p135 = scmp.eq.s32.totalorder %s15, 3
      %p136 = por %p134, %p135
      %p137 = scmp.ne.s32.totalorder %s126, %s127
      %p138 = scmp.eq.s32.totalorder %s15, 0
      %p139 = por %p137, %p138
      %p140 = scmp.ne.s32.totalorder %s126, %s127
      %p141 = scmp.eq.s32.totalorder %s16, 3
      %p142 = por %p140, %p141
      %p144 = scmp.ne.s32.totalorder %s127, %s143
      %p145 = scmp.eq.s32.totalorder %s16, 0
      %p146 = por %p144, %p145
      %p147 = scmp.le.s32.totalorder 1, %s10
      %p148 = scmp.lt.s32.totalorder %s10, 5
      %p149 = pnand %p147, %p148
      %p150 = pneg %p149
      // Predicated region
      $region9: #{sobel_layer.3} parent=5 // pred_check
        _
      $region10: #{sobel_layer.3} parent=5 // pred_check_branch
        %152 = sbr.rel (%p149) target = $region12
      $region11: #{sobel_layer.3} parent=5 // pred_region
        %s153 = ssub.s32 %s10, 1
        // Predicated region
        $region13: #{sobel_layer.3} parent=11 // pred_check
          %p154 = pneg %p43
        $region14: #{sobel_layer.3} parent=11 // pred_check_branch
          %156 = sbr.rel (%p154) target = $region16
        $region15: #{sobel_layer.3} parent=11 // pred_region
          %s158 = ssub.s32 16, 16
          %159 = vsyncadd [#allocation3], %s158
          %s161 = sshll.u32 %s0, 4
          %s162 = int_to_ptr.vmem [resolvable:$true] %s161
          %164 = dma.vmem_to_smem %s162, 16, [#allocation2], [#allocation3]
        $region16: #{sobel_layer.3} parent=11 // pred_fallthru
          _
      $region12: #{sobel_layer.3} parent=5 // pred_fallthru
        _
      %p165 = scmp.lt.s32.totalorder %s10, 4
      // Predicated region
      $region17: #{sobel_layer.3} parent=5 // pred_check
        %p166 = pneg %p165
      $region18: #{sobel_layer.3} parent=5 // pred_check_branch
        %168 = sbr.rel (%p166) target = $region20
      $region19: #{sobel_layer.3} parent=5 // pred_region
        // Predicated region
        $region21: #{sobel_layer.3} parent=19 // pred_check
          %p169 = pneg %p69
        $region22: #{sobel_layer.3} parent=19 // pred_check_branch
          %171 = sbr.rel (%p169) target = $region24
        $region23: #{sobel_layer.3} parent=19 // pred_region
          %p172 = scmp.lt.s32.totalorder %s18, 0
          %s173 = scalar_select %p172, %s18, 0
          %s174 = smul.u32 2, %s173
          %p175 = scmp.lt.s32.totalorder %s17, 1
          %s176 = scalar_select %p175, %s17, 1
          %p177 = scmp.lt.s32.totalorder %s174, 1
          %s178 = scalar_select %p177, %s174, 1
          %s179 = smul.addr %s176, 2
          %s180 = sadd.s32 %s178, %s179
          %s181 = smul.addr %s180, 8
          %s182 = scalar_lea.vmem %s1, %s181
          %p183 = scmp.lt.s32.totalorder %s18, 0
          %s184 = scalar_select %p183, %s18, 0
          %s185 = smul.u32 2, %s184
        $region24: #{sobel_layer.3} parent=19 // pred_fallthru
          _
        // Predicated region
        $region25: #{sobel_layer.3} parent=19 // pred_check
          %p186 = pneg %p105
        $region26: #{sobel_layer.3} parent=19 // pred_check_branch
          %188 = sbr.rel (%p186) target = $region28
        $region27: #{sobel_layer.3} parent=19 // pred_region
          %s189 = smul.u32 %s18, 2
          %s190 = ssub.s32 %s189, 1
          %p191 = scmp.gt.s32.totalorder %s190, 0
          %s192 = scalar_select %p191, %s190, 0
          %p193 = scmp.lt.s32.totalorder %s17, 1
          %s194 = scalar_select %p193, %s17, 1
          %p195 = scmp.lt.s32.totalorder %s192, 1
          %s196 = scalar_select %p195, %s192, 1
          %s197 = smul.addr %s194, 2
          %s198 = sadd.s32 %s196, %s197
          %s199 = smul.addr %s198, 8
          %s200 = scalar_lea.vmem %s2, %s199
          %s201 = smul.u32 %s18, 2
          %s202 = ssub.s32 %s201, 1
          %p203 = scmp.gt.s32.totalorder %s202, 0
          %s204 = scalar_select %p203, %s202, 0
        $region28: #{sobel_layer.3} parent=19 // pred_fallthru
          _
      $region20: #{sobel_layer.3} parent=5 // pred_fallthru
        _
      %p205 = scmp.le.s32.totalorder 1, %s10
      %p206 = scmp.lt.s32.totalorder %s10, 5
      %p207 = pnand %p205, %p206
      %p208 = pneg %p207
      // Predicated region
      $region29: #{sobel_layer.3} parent=5 // pred_check
        _
      $region30: #{sobel_layer.3} parent=5 // pred_check_branch
        %210 = sbr.rel (%p207) target = $region32
      $region31: #{sobel_layer.3} parent=5 // pred_region
        %s211 = ssub.s32 %s10, 1
        // Predicated region
        $region33: #{sobel_layer.3} parent=31 // pred_check
          %p212 = pneg %p43
        $region34: #{sobel_layer.3} parent=31 // pred_check_branch
          %214 = sbr.rel (%p212) target = $region36
        $region35: #{sobel_layer.3} parent=31 // pred_region
          %215 = dma.done [#allocation3], 16
        $region36: #{sobel_layer.3} parent=31 // pred_fallthru
          _
        %216 = sfence
        %p217 = pneg %p43
        %p218 = pneg %p40
        %p219 = scmp.lt.s32.totalorder %s20, 0
        %s220 = scalar_select %p219, %s20, 0
        %s221 = smul.u32 2, %s220
        %p222 = scmp.lt.s32.totalorder %s19, 1
        %s223 = scalar_select %p222, %s19, 1
        %p224 = scmp.lt.s32.totalorder %s221, 1
        %s225 = scalar_select %p224, %s221, 1
        %s226 = smul.addr %s223, 2
        %s227 = sadd.s32 %s225, %s226
        %s228 = smul.addr %s227, 8
        %s229 = scalar_lea.vmem %s1, %s228
        %p230 = pneg %p75
        %p231 = pneg %p72
        %s232 = smul.u32 %s20, 2
        %s233 = ssub.s32 %s232, 1
        %p234 = scmp.gt.s32.totalorder %s233, 0
        %s235 = scalar_select %p234, %s233, 0
        %p236 = scmp.lt.s32.totalorder %s19, 1
        %s237 = scalar_select %p236, %s19, 1
        %p238 = scmp.lt.s32.totalorder %s235, 1
        %s239 = scalar_select %p238, %s235, 1
        %s240 = smul.addr %s237, 2
        %s241 = sadd.s32 %s239, %s240
        %s242 = smul.addr %s241, 8
        %s243 = scalar_lea.vmem %s2, %s242
        %p244 = pneg %p111
        %p245 = pneg %p108
        %p246 = pneg %p139
        %p247 = pneg %p136
        %s248 = sand.u32 %s126, 1
        %s249 = sand.u32 %s126, 1
        %s250 = smul.addr %s249, 16
        %s251 = scalar_lea.vmem [#allocation4], %s250
        %p252 = scmp.lt.s32.totalorder %s20, 0
        %s253 = scalar_select %p252, %s20, 0
        %s254 = smul.u32 2, %s253
        %p255 = scmp.lt.s32.totalorder %s19, 1
        %s256 = scalar_select %p255, %s19, 1
        %p257 = scmp.lt.s32.totalorder %s254, 1
        %s258 = scalar_select %p257, %s254, 1
        %s259 = smul.addr %s256, 2
        %s260 = sadd.s32 %s258, %s259
        %s261 = smul.addr %s260, 8
        %s262 = scalar_lea.vmem %s1, %s261
        %p263 = scmp.lt.s32.totalorder %s20, 0
        %s264 = scalar_select %p263, %s20, 0
        %s265 = smul.u32 2, %s264
        %s266 = smul.u32 %s20, 2
        %s267 = ssub.s32 %s266, 1
        %p268 = scmp.gt.s32.totalorder %s267, 0
        %s269 = scalar_select %p268, %s267, 0
        %p270 = scmp.lt.s32.totalorder %s19, 1
        %s271 = scalar_select %p270, %s19, 1
        %p272 = scmp.lt.s32.totalorder %s269, 1
        %s273 = scalar_select %p272, %s269, 1
        %s274 = smul.addr %s271, 2
        %s275 = sadd.s32 %s273, %s274
        %s276 = smul.addr %s275, 8
        %s277 = scalar_lea.vmem %s2, %s276
        %s278 = smul.u32 %s20, 2
        %s279 = ssub.s32 %s278, 1
        %p280 = scmp.gt.s32.totalorder %s279, 0
        %s281 = scalar_select %p280, %s279, 0
        %s282 = smul.u32 2, %s20
        %s283 = ssub.s32 3, %s282
        %p284 = scmp.lt.s32.totalorder %s283, 2
        %s285 = scalar_select %p284, %s283, 2
        %s286 = smul.u32 128, %s285
        %v287 = vlaneseq
        %v288 = vshrl.u32 %v287, 7
        %v289 = vadd.s32 %v288, 8
        %s290 = smul.u32 %s20, 16
        %v291 = vstv %s290
        %v292 = vadd.s32 %v288, %v291
        %v293 = vadd.s32 %v289, %v291
        %vm294 = vcmp.lt.s32.totalorder %v292, 16
        %vm295 = vcmp.lt.s32.totalorder %v293, 16
        %v296 = vld [vmem:[%s262] sm:$0xff]
        %v297 = vld [vmem:[%s262 + $0x8] sm:$0xff]
        %v298 = vsel %vm294, %v296, 0.0
        %v299 = vsel %vm295, %v297, 0.0
        %p300 = scmp.gt.s32.totalorder %s20, 0
        %v301 = vld [vmem:[%s277 + $0x7] sm:$0x1]
        %s302 = scalar_select %p300, 1, 0
        %v303 = vstv %s302
        %vm304 = vcmp.eq.s32.totalorder %v303, 1
        %v305 = vsel %vm304, %v301, 0.0
        %vm308 = vcmask 1040384
        %v309 = vrot.slane %v298, 7
        %v310 = vrot.slane %v299, 7
        %v311 = vsel %vm308, %v309, %v310
        %v314 = vsel %vm308, %v305, %v309
        %vm315 = vcmask 130048
        %v316 = vsel %vm315, %v298, 0.0
        %v317 = vsel %vm315, %v299, 0.0
        %318 = vrot.lane.b32.xlu0 %v298, 1
        %v319 = vpop.permute.xlu0 %318
        %320 = vrot.lane.b32.xlu0 %v299, 1
        %v321 = vpop.permute.xlu0 %320
        %vm324 = vcmask 7168
        %v325 = vsel %vm324, 0.0, %v319
        %v326 = vsel %vm324, 0.0, %v321
        %v327 = vsel %vm315, %v314, 0.0
        %v328 = vsel %vm315, %v311, 0.0
        %v329 = vsub.f32 %v316, %v325
        %v330 = vsub.f32 %v317, %v326
        %v331 = vand.u32 2147483647, %v329
        %v332 = vand.u32 2147483647, %v330
        %v333 = vsub.f32 %v316, %v327
        %v334 = vsub.f32 %v317, %v328
        %v335 = vand.u32 2147483647, %v333
        %v336 = vand.u32 2147483647, %v334
        %s337 = sld [smem:[#allocation2]]
        %s338 = sld [smem:[#allocation2 + $0x1]]
        %s339 = sld [smem:[#allocation2 + $0x2]]
        %s340 = sld [smem:[#allocation2 + $0x3]]
        %v341 = vstv %s337
        %v342 = vsub.f32 %v331, %v341
        %v343 = vsub.f32 %v332, %v341
        %v344 = vstv %s338
        %v345 = vmul.f32 %v342, %v344
        %v346 = vmul.f32 %v343, %v344
        %v347 = vstv %s339
        %v348 = vsub.f32 %v335, %v347
        %v349 = vsub.f32 %v336, %v347
        %v350 = vstv %s340
        %v351 = vmul.f32 %v348, %v350
        %v352 = vmul.f32 %v349, %v350
        %v353 = vadd.f32 %v345, %v351
        %v354 = vadd.f32 %v346, %v352
        %vm355 = vcmask 138240
        %356 = vst.msk [vmem:[%s251] sm:$0xff] %vm355, %v353
        %357 = vst.msk [vmem:[%s251 + $0x8] sm:$0xff] %vm355, %v354
        %s358 = sand.u32 %s126, 1
        %s359 = sand.u32 %s126, 1
        %s360 = smul.addr %s359, 16
        %s361 = scalar_lea.vmem [#allocation4], %s360
        // Predicated region
        $region37: #{sobel_layer.3} parent=31 // pred_check
          %p362 = pneg %p136
        $region38: #{sobel_layer.3} parent=31 // pred_check_branch
          %364 = sbr.rel (%p362) target = $region40
        $region39: #{sobel_layer.3} parent=31 // pred_region
          %s365 = smul.u32 2, %s20
          %s366 = ssub.s32 3, %s365
          %p367 = scmp.lt.s32.totalorder %s366, 2
          %s368 = scalar_select %p367, %s366, 2
          %s369 = smul.u32 128, %s368
          %p370 = scmp.ne.s32.totalorder 0, %s369
          %s371 = smul.addr %s19, 3
          %s372 = sadd.s32 %s365, %s371
          %s373 = smul.addr %s372, 8
          %s374 = scalar_lea.vmem %s3, %s373
          // Predicated region
          $region41: #{sobel_layer.3} parent=39 // pred_check
            %p375 = pneg %p370
          $region42: #{sobel_layer.3} parent=39 // pred_check_branch
            %377 = sbr.rel (%p375) target = $region44
          $region43: #{sobel_layer.3} parent=39 // pred_region
            // Predicated region
            $region45: #{sobel_layer.3} parent=43 // pred_check
              _
            $region46: #{sobel_layer.3} parent=43 // pred_check_branch
              %379 = sbr.rel (0) target = $region48
            $region47: #{sobel_layer.3} parent=43 // pred_region
              // Predicated region
              $region67: #{sobel_layer.3} parent=47 // pred_check
                _
              $region68: #{sobel_layer.3} parent=47 // pred_check_branch
                %431 = sbr.rel (0) target = $region70
              $region69: #{sobel_layer.3} parent=47 // pred_region
                %s432 = sshrl.u32 %s368, 1
                // While loop
                $region71: #{sobel_layer.3} parent=69 // loop_pre_header
                  _
                $region72: #{sobel_layer.3} parent=69 // loop_header
                  %s434 = sphi 0, %s436
                  %p435 = scmp.ge.s32.totalorder %s434, %s432
                  %s439 = sphi 0, %s448
                  %s440 = sphi %s361, %s451
                  %s441 = sphi %s374, %s452
                $region73: #{sobel_layer.3} parent=69 // loop_header_branch
                  %438 = sbr.rel (%p435) target = $region77
                $region74: #{sobel_layer.3} parent=69 // loop_body
                  %v442 = vld [vmem:[%s440] sm:$0xff]
                  %443 = vst [vmem:[%s441] sm:$0xff] %v442
                  %v444 = vld [vmem:[%s440 + $0x8] sm:$0xff]
                  %445 = vst [vmem:[%s441 + $0x8] sm:$0xff] %v444
                  %s446 = sadd.s32 1, %s439
                  %p447 = scmp.ge.s32.totalorder %s446, %s432
                  %s448 = scalar_select %p447, 0, %s446
                  %s449 = smul.u32 %s448, 16
                  %s450 = smul.u32 %s448, 16
                  %s451 = scalar_lea.vmem %s361, %s449 [#allocation4]
                  %s452 = scalar_lea.vmem %s374, %s450
                $region75: #{sobel_layer.3} parent=69 // loop_footer
                  %s436 = sadd.s32 %s434, 1
                $region76: #{sobel_layer.3} parent=69 // loop_footer_branch
                  %433 = sbr.rel target = $region72
                $region77: #{sobel_layer.3} parent=69 // loop_exit
                  _
                %s453 = sshrl.u32 %s368, 1
                %s454 = sand.u32 %s368, 1
                %s455 = smul.u32 %s453, 2
                %s456 = smul.u32 8, %s455
                %s457 = scalar_lea.vmem %s361, %s456 [#allocation4]
                %s458 = smul.u32 8, %s455
                %s459 = scalar_lea.vmem %s374, %s458
                // While loop
                $region78: #{sobel_layer.3} parent=69 // loop_pre_header
                  _
                $region79: #{sobel_layer.3} parent=69 // loop_header
                  %s461 = sphi 0, %s463
                  %p462 = scmp.ge.s32.totalorder %s461, %s454
                  %s466 = sphi 0, %s473
                  %s467 = sphi %s457, %s476
                  %s468 = sphi %s459, %s477
                $region80: #{sobel_layer.3} parent=69 // loop_header_branch
                  %465 = sbr.rel (%p462) target = $region84
                $region81: #{sobel_layer.3} parent=69 // loop_body
                  %v469 = vld [vmem:[%s467] sm:$0xff]
                  %470 = vst [vmem:[%s468] sm:$0xff] %v469
                  %s471 = sadd.s32 1, %s466
                  %p472 = scmp.ge.s32.totalorder %s471, %s454
                  %s473 = scalar_select %p472, 0, %s471
                  %s474 = smul.u32 %s473, 8
                  %s475 = smul.u32 %s473, 8
                  %s476 = scalar_lea.vmem %s457, %s474 [#allocation4]
                  %s477 = scalar_lea.vmem %s459, %s475
                $region82: #{sobel_layer.3} parent=69 // loop_footer
                  %s463 = sadd.s32 %s461, 1
                $region83: #{sobel_layer.3} parent=69 // loop_footer_branch
                  %460 = sbr.rel target = $region79
                $region84: #{sobel_layer.3} parent=69 // loop_exit
                  _
              $region70: #{sobel_layer.3} parent=47 // pred_fallthru
                _
              // Predicated region
              $region85: #{sobel_layer.3} parent=47 // pred_check
                _
              $region86: #{sobel_layer.3} parent=47 // pred_check_branch
                %479 = sbr.rel target = $region88
              $region87: #{sobel_layer.3} parent=47 // pred_region
                _
              $region88: #{sobel_layer.3} parent=47 // pred_fallthru
                _
            $region48: #{sobel_layer.3} parent=43 // pred_fallthru
              _
            // Predicated region
            $region49: #{sobel_layer.3} parent=43 // pred_check
              _
            $region50: #{sobel_layer.3} parent=43 // pred_check_branch
              %381 = sbr.rel target = $region52
            $region51: #{sobel_layer.3} parent=43 // pred_region
              %s383 = ssub.s32 256, 1
              %s384 = sshrl.u32 %s368, 1
              // While loop
              $region53: #{sobel_layer.3} parent=51 // loop_pre_header
                _
              $region54: #{sobel_layer.3} parent=51 // loop_header
                %s386 = sphi 0, %s388
                %p387 = scmp.ge.s32.totalorder %s386, %s384
                %s391 = sphi 0, %s400
                %s392 = sphi %s361, %s403
                %s393 = sphi %s374, %s404
              $region55: #{sobel_layer.3} parent=51 // loop_header_branch
                %390 = sbr.rel (%p387) target = $region59
              $region56: #{sobel_layer.3} parent=51 // loop_body
                %v394 = vld [vmem:[%s392] sm:%s383]
                %395 = vst [vmem:[%s393] sm:%s383] %v394
                %v396 = vld [vmem:[%s392 + $0x8] sm:%s383]
                %397 = vst [vmem:[%s393 + $0x8] sm:%s383] %v396
                %s398 = sadd.s32 1, %s391
                %p399 = scmp.ge.s32.totalorder %s398, %s384
                %s400 = scalar_select %p399, 0, %s398
                %s401 = smul.u32 %s400, 16
                %s402 = smul.u32 %s400, 16
                %s403 = scalar_lea.vmem %s361, %s401 [#allocation4]
                %s404 = scalar_lea.vmem %s374, %s402
              $region57: #{sobel_layer.3} parent=51 // loop_footer
                %s388 = sadd.s32 %s386, 1
              $region58: #{sobel_layer.3} parent=51 // loop_footer_branch
                %385 = sbr.rel target = $region54
              $region59: #{sobel_layer.3} parent=51 // loop_exit
                _
              %s405 = sshrl.u32 %s368, 1
              %s406 = sand.u32 %s368, 1
              %s407 = smul.u32 %s405, 2
              %s408 = smul.u32 8, %s407
              %s409 = scalar_lea.vmem %s361, %s408 [#allocation4]
              %s410 = smul.u32 8, %s407
              %s411 = scalar_lea.vmem %s374, %s410
              // While loop
              $region60: #{sobel_layer.3} parent=51 // loop_pre_header
                _
              $region61: #{sobel_layer.3} parent=51 // loop_header
                %s413 = sphi 0, %s415
                %p414 = scmp.ge.s32.totalorder %s413, %s406
                %s418 = sphi 0, %s425
                %s419 = sphi %s409, %s428
                %s420 = sphi %s411, %s429
              $region62: #{sobel_layer.3} parent=51 // loop_header_branch
                %417 = sbr.rel (%p414) target = $region66
              $region63: #{sobel_layer.3} parent=51 // loop_body
                %v421 = vld [vmem:[%s419] sm:%s383]
                %422 = vst [vmem:[%s420] sm:%s383] %v421
                %s423 = sadd.s32 1, %s418
                %p424 = scmp.ge.s32.totalorder %s423, %s406
                %s425 = scalar_select %p424, 0, %s423
                %s426 = smul.u32 %s425, 8
                %s427 = smul.u32 %s425, 8
                %s428 = scalar_lea.vmem %s409, %s426 [#allocation4]
                %s429 = scalar_lea.vmem %s411, %s427
              $region64: #{sobel_layer.3} parent=51 // loop_footer
                %s415 = sadd.s32 %s413, 1
              $region65: #{sobel_layer.3} parent=51 // loop_footer_branch
                %412 = sbr.rel target = $region61
              $region66: #{sobel_layer.3} parent=51 // loop_exit
                _
            $region52: #{sobel_layer.3} parent=43 // pred_fallthru
              _
          $region44: #{sobel_layer.3} parent=39 // pred_fallthru
            _
          %480 = vnop
        $region40: #{sobel_layer.3} parent=31 // pred_fallthru
          _
      $region32: #{sobel_layer.3} parent=5 // pred_fallthru
        _
      %p481 = scmp.le.s32.totalorder 2, %s10
      // Predicated region
      $region89: #{sobel_layer.3} parent=5 // pred_check
        %p482 = pneg %p481
      $region90: #{sobel_layer.3} parent=5 // pred_check_branch
        %484 = sbr.rel (%p482) target = $region92
      $region91: #{sobel_layer.3} parent=5 // pred_region
        %s485 = ssub.s32 %s10, 2
        // Predicated region
        $region93: #{sobel_layer.3} parent=91 // pred_check
          %p486 = pneg %p142
        $region94: #{sobel_layer.3} parent=91 // pred_check_branch
          %488 = sbr.rel (%p486) target = $region96
        $region95: #{sobel_layer.3} parent=91 // pred_region
          %s489 = sand.u32 %s127, 1
          %s490 = sand.u32 %s127, 1
          %s491 = smul.addr %s490, 16
          %s492 = scalar_lea.vmem [#allocation4], %s491
        $region96: #{sobel_layer.3} parent=91 // pred_fallthru
          _
      $region92: #{sobel_layer.3} parent=5 // pred_fallthru
        _
    $region6: #{sobel_layer.3} parent=1 // loop_footer
      %s14 = sadd.s32 1, %s10
    $region7: #{sobel_layer.3} parent=1 // loop_footer_branch
      %9 = sbr.rel target = $region3
    $region8: #{sobel_layer.3} parent=1 // loop_exit
      _
    %493 = vsyncpa [#allocation3], 1
    %s494 = scalar_lea.sflag [#allocation3], 1
    %495 = vsyncpa %s494, 1

</llo_original>
